<compile_context>
chip_gen: v7x
topology: tpu7x:2x2x1
jax: 0.10.0
libtpu: 0.0.40
codegen_flags: <defaults>
</compile_context>

<pallas_src>
import functools

import jax
import jax.numpy as jnp
from jax.experimental import pallas as pl
from jax.experimental.pallas import tpu as pltpu

_LANES = 128


def _dot(a, b):
    return jnp.dot(a, b, preferred_element_type=jnp.float32)


def _round_up(x, n):
    return ((x + n - 1) // n) * n


# ------------------------------------------------------------------ kernels --

def _mlp_kernel(x_ref, w_mlp_ref, v_w_ref, v_b_ref, out_ref):
    """MLP has no time dependence: two dense, lane-aligned matmuls."""
    h = jax.nn.sigmoid(_dot(x_ref[...], w_mlp_ref[...]))            # (B*T, k)
    out_ref[...] = (_dot(h, v_w_ref[...]) + v_b_ref[...]).astype(out_ref.dtype)


def _make_rnn_kernel(B, T, k):
    def kernel(x_ref, w_ih_ref, w_hh_ref, v_w_ref, v_b_ref, out_ref, hs_ref):
        # Hoisted x-side contribution for every timestep (batch-major), kept as
        # a traced value: one (B*T, m+1) @ (m+1, k) matmul, no VMEM scratch.
        xg = _dot(x_ref[...], w_ih_ref[...]).reshape(B, T, k)
        w_hh = w_hh_ref[...]                                         # hoisted load

        h = jnp.zeros((B, k), jnp.float32)
        # TODO(synk): cap the unroll factor if T becomes large.
        for t in range(T):                                           # static unroll
            h = jnp.tanh(xg[:, t, :] + _dot(h, w_hh))
            hs_ref[:, t, :] = h                                      # batch-major

        # Single lane-dense output projection over all timesteps.
        h_all = hs_ref[...].reshape(B * T, k)
        out_ref[...] = (_dot(h_all, v_w_ref[...]) + v_b_ref[...]).astype(out_ref.dtype)

    return kernel


def _make_lstm_kernel(B, T, k, wide):
    G = 4 * k                                   # fused gate width, order i|f|g|o

    def kernel(x_ref, w_x_ref, w_h_ref, v_w_ref, v_b_ref, out_ref, hs_ref):
        # Hoisted x-side gate pre-activations for all timesteps (batch-major).
        xg = _dot(x_ref[...], w_x_ref[...]).reshape(B, T, G)
        w_h = w_h_ref[...]                                           # hoisted load

        if wide:
            # 4k == 128: keep h/c 128 lanes wide.  sigmoid/tanh are computed
            # once per step over the full gates vreg; pltpu.roll aligns the
            # f / g / o chunks with lanes [0, k).  Lanes >= k of h/c carry
            # bounded junk which never contaminates valid lanes because the
            # corresponding rows of W_h and V are zero.
            h = jnp.zeros((B, G), jnp.float32)
            c = jnp.zeros((B, G), jnp.float32)
            for t in range(T):                                       # static unroll
                gates = xg[:, t, :] + _dot(h, w_h)                   # (B, 128)
                sg = jax.nn.sigmoid(gates)                           # i|f|.|o valid
                th = jnp.tanh(gates)                                 # .|.|g|. valid
                f_al = pltpu.roll(sg, shift=G - k, axis=1)           # f -> lanes [0,k)
                g_al = pltpu.roll(th, shift=G - 2 * k, axis=1)       # g -> lanes [0,k)
                o_al = pltpu.roll(sg, shift=G - 3 * k, axis=1)       # o -> lanes [0,k)
                c = f_al * c + sg * g_al                             # f*c + i*g
                h = o_al * jnp.tanh(c)
                hs_ref[:, t, :] = h                                  # batch-major
            width = G
        else:
            # Fallback for 4k != 128: whole-vreg nonlinearities + static slices.
            h = jnp.zeros((B, k), jnp.float32)
            c = jnp.zeros((B, k), jnp.float32)
            for t in range(T):
                gates = xg[:, t, :] + _dot(h, w_h)                   # (B, 4k)
                sg = jax.nn.sigmoid(gates)
                th = jnp.tanh(gates)
                i = sg[:, 0 * k:1 * k]
                f = sg[:, 1 * k:2 * k]
                g = th[:, 2 * k:3 * k]
                o = sg[:, 3 * k:4 * k]
                c = f * c + i * g
                h = o * jnp.tanh(c)
                hs_ref[:, t, :] = h
            width = k

        h_all = hs_ref[...].reshape(B * T, width)
        out_ref[...] = (_dot(h_all, v_w_ref[...]) + v_b_ref[...]).astype(out_ref.dtype)

    return kernel


# ------------------------------------------------------ parameter preparation --

def prepare_weights(params, architecture):
    """One-time weight preparation, done OUTSIDE the jitted forward:
    fuse LSTM gate weights (i|f|g|o), zero-pad the output projection to a
    lane-dense width, and (when 4k == 128) zero-pad W_h / V so the LSTM
    recurrence runs on a 128-lane-wide hidden state with no lane extraction."""
    f32 = jnp.float32
    k, m = params["v_w"].shape
    n_pad = _round_up(max(m, 1), _LANES)
    v_b = jnp.zeros((1, n_pad), f32).at[:, :m].set(params["v_b"].astype(f32))

    if architecture == "MLP":
        v_w = jnp.zeros((k, n_pad), f32).at[:, :m].set(params["v_w"].astype(f32))
        return (params["w_mlp"].astype(f32), v_w, v_b)

    if architecture == "RNN":
        v_w = jnp.zeros((k, n_pad), f32).at[:, :m].set(params["v_w"].astype(f32))
        return (params["w_ih"].astype(f32), params["w_hh"].astype(f32), v_w, v_b)

    if architecture == "LSTM":
        G = 4 * k
        w_x = jnp.concatenate([params["w_ii"], params["w_if"],
                               params["w_ig"], params["w_io"]], axis=1).astype(f32)
        w_h_k = jnp.concatenate([params["w_hi"], params["w_hf"],
                                 params["w_hg"], params["w_ho"]], axis=1).astype(f32)
        if G == _LANES:
            # Wide-hidden variant: rows >= k of W_h / V are zero.
            w_h = jnp.zeros((G, G), f32).at[:k, :].set(w_h_k)
            v_w = jnp.zeros((G, n_pad), f32).at[:k, :m].set(params["v_w"].astype(f32))
        else:
            w_h = w_h_k
            v_w = jnp.zeros((k, n_pad), f32).at[:, :m].set(params["v_w"].astype(f32))
        return (w_x, w_h, v_w, v_b)

    raise RuntimeError("Unknown architecture: {}".format(architecture))


# ------------------------------------------------------------------ wrapper --

_VMEM_SPEC = pl.BlockSpec(memory_space=pltpu.MemorySpace.VMEM)


@functools.partial(jax.jit, static_argnames=("architecture", "m"))
def model_forward(inputs, weights, architecture, m):
    """inputs: (B, T, m+1) f32; weights: output of prepare_weights.
    Returns logits (B, T, m) f32."""
    B, T, d_in = inputs.shape
    n_pad = weights[-1].shape[-1]
    # Contiguous flatten only — no transpose, no extra HBM round trip.
    x2d = inputs.astype(jnp.float32).reshape(B * T, d_in)

    if architecture == "MLP":
        kernel = _mlp_kernel
        scratch = []
    elif architecture == "RNN":
        k = weights[1].shape[0]
        kernel = _make_rnn_kernel(B, T, k)
        scratch = [pltpu.VMEM((B, T, k), jnp.float32)]      # batch-major hiddens
    elif architecture == "LSTM":
        G = weights[0].shape[1]
        k = G // 4
        wide = weights[1].shape[0] == G                      # W_h padded to (G, G)
        kernel = _make_lstm_kernel(B, T, k, wide)
        scratch = [pltpu.VMEM((B, T, G if wide else k), jnp.float32)]
    else:
        raise RuntimeError("Unknown architecture: {}".format(architecture))

    out2d = pl.pallas_call(
        kernel,
        out_shape=jax.ShapeDtypeStruct((B * T, n_pad), jnp.float32),
        in_specs=[_VMEM_SPEC] * (1 + len(weights)),
        out_specs=_VMEM_SPEC,
        scratch_shapes=scratch,
    )(x2d, *weights)

    # Free contiguous reshape + tiny slice to drop the lane padding.
    return out2d.reshape(B, T, n_pad)[:, :, :m]


# ---------------------------------------------------------------- reference --

def model_forward_ref(inputs, params, architecture):
    """Pure-JAX reference matching the PyTorch forward exactly."""
    B, T, _ = inputs.shape
    k = params["v_w"].shape[0]
    h = jnp.zeros((B, k), jnp.float32)
    c = jnp.zeros((B, k), jnp.float32)
    outs = []
    for t in range(T):
        xt = inputs[:, t, :]
        if architecture == "MLP":
            h = jax.nn.sigmoid(xt @ params["w_mlp"])
        elif architecture == "RNN":
            h = jnp.tanh(xt @ params["w_ih"] + h @ params["w_hh"])
        elif architecture == "LSTM":
            i = jax.nn.sigmoid(xt @ params["w_ii"] + h @ params["w_hi"])
            f = jax.nn.sigmoid(xt @ params["w_if"] + h @ params["w_hf"])
            g = jnp.tanh(xt @ params["w_ig"] + h @ params["w_hg"])
            o = jax.nn.sigmoid(xt @ params["w_io"] + h @ params["w_ho"])
            c = f * c + i * g
            h = o * jnp.tanh(c)
        outs.append(h @ params["v_w"] + params["v_b"][0])
    return jnp.stack(outs, axis=1)


def init_params(key, m, k):
    """Deterministic randn-style init matching the module's shapes."""
    d_in = m + 1
    shapes = {
        "w_mlp": (d_in, k),
        "w_ih": (d_in, k), "w_hh": (k, k),
        "w_ii": (d_in, k), "w_hi": (k, k),
        "w_if": (d_in, k), "w_hf": (k, k),
        "w_ig": (d_in, k), "w_hg": (k, k),
        "w_io": (d_in, k), "w_ho": (k, k),
        "v_w": (k, m),      # nn.Linear weight stored pre-transposed: (k, m)
        "v_b": (1, m),      # nn.Linear bias
    }
    params = {}
    keys = jax.random.split(key, len(shapes))
    for sub, (name, shape) in zip(keys, sorted(shapes.items())):
        params[name] = jax.random.normal(sub, shape, dtype=jnp.float32)
    return params


if __name__ == "__main__":
    # Small shapes consistent with the module: m symbols (+1 delimiter), k hidden.
    B, T, m, k = 2, 8, 8, 32

    key = jax.random.PRNGKey(0)
    k_params, k_inputs = jax.random.split(key)
    params = init_params(k_params, m, k)
    inputs = jax.random.normal(k_inputs, (B, T, m + 1), dtype=jnp.float32)

    ok = True
    for arch in ("MLP", "RNN", "LSTM"):
        weights = prepare_weights(params, arch)          # one-time fuse / pad
        out = model_forward(inputs, weights, architecture=arch, m=m)
        out = jax.block_until_ready(out)
        ref = model_forward_ref(inputs, params, arch)
        assert out.shape == (B, T, m), (arch, out.shape)
        if not jnp.allclose(out, ref, rtol=1e-4, atol=1e-4):
            ok = False
            print(f"MISMATCH in {arch}: max err "
                  f"{float(jnp.max(jnp.abs(out - ref)))}")

    # TODO(synk): `Model.loss` (nn.CrossEntropyLoss) is not part of forward();
    # it is intentionally not implemented as a kernel.
    if ok:
        print("KERNEL_OK")
</pallas_src>

<mosaic_0001>
module attributes {stable_mosaic.version = 11 : i64} {
  func.func @_mlp_kernel(%arg0: memref<16x9xf32, #tpu.memory_space<vmem>>, %arg1: memref<9x32xf32, #tpu.memory_space<vmem>>, %arg2: memref<32x128xf32, #tpu.memory_space<vmem>>, %arg3: memref<1x128xf32, #tpu.memory_space<vmem>>, %arg4: memref<16x128xf32, #tpu.memory_space<vmem>>) attributes {dimension_semantics = [], scalar_prefetch = 0 : i64, scratch_operands = 0 : i64, tpu.core_type = #tpu.core_type<tc>} {
    %c0 = arith.constant 0 : index
    %c0_0 = arith.constant 0 : index
    %0 = vector.load %arg0[%c0, %c0_0] : memref<16x9xf32, #tpu.memory_space<vmem>>, vector<16x9xf32>
    %c0_1 = arith.constant 0 : index
    %c0_2 = arith.constant 0 : index
    %1 = vector.load %arg1[%c0_1, %c0_2] : memref<9x32xf32, #tpu.memory_space<vmem>>, vector<9x32xf32>
    %cst = arith.constant dense<0.000000e+00> : vector<16x32xf32>
    %2 = tpu.matmul %0, %1, %cst {dimension_numbers = #tpu.dot_dimension_numbers<[1], [0], [0], [1], [0, 0, 1, 1], [], []>} : vector<16x9xf32>, vector<9x32xf32>, vector<16x32xf32> -> vector<16x32xf32>
    %3 = arith.negf %2 : vector<16x32xf32>
    %4 = math.exp %3 : vector<16x32xf32>
    %cst_3 = arith.constant 1.000000e+00 : f32
    %5 = vector.broadcast %cst_3 : f32 to vector<16x32xf32>
    %6 = arith.addf %5, %4 : vector<16x32xf32>
    %7 = arith.divf %5, %6 : vector<16x32xf32>
    %c0_4 = arith.constant 0 : index
    %c0_5 = arith.constant 0 : index
    %8 = vector.load %arg2[%c0_4, %c0_5] : memref<32x128xf32, #tpu.memory_space<vmem>>, vector<32x128xf32>
    %cst_6 = arith.constant dense<0.000000e+00> : vector<16x128xf32>
    %9 = tpu.matmul %7, %8, %cst_6 {dimension_numbers = #tpu.dot_dimension_numbers<[1], [0], [0], [1], [0, 0, 1, 1], [], []>} : vector<16x32xf32>, vector<32x128xf32>, vector<16x128xf32> -> vector<16x128xf32>
    %c0_7 = arith.constant 0 : index
    %c0_8 = arith.constant 0 : index
    %10 = vector.load %arg3[%c0_7, %c0_8] : memref<1x128xf32, #tpu.memory_space<vmem>>, vector<1x128xf32>
    %11 = vector.broadcast %10 : vector<1x128xf32> to vector<16x128xf32>
    %12 = arith.addf %9, %11 : vector<16x128xf32>
    %c0_9 = arith.constant 0 : index
    %c0_10 = arith.constant 0 : index
    %13 = vector.load %arg4[%c0_9, %c0_10] : memref<16x128xf32, #tpu.memory_space<vmem>>, vector<16x128xf32>
    tpu.vector_store %arg4[%c0_9, %c0_10], %12 {strides = array<i32>} : memref<16x128xf32, #tpu.memory_space<vmem>>, vector<16x128xf32>,
    return
  }
}

</mosaic_0001>

<llo_original>
// kernel: model_forward.1
$region0: #{model_forward.1}
  #allocation0 [shape = 'u32[]', space=smem, size = 0x4, offset = 0x4, fixed_abs, tag = 'smem constant byte address 0x4 - core index']
  #allocation1 [shape = 'u32[144,128]{1,0:T(1,128)}', space=vmem, size = 0x12000, scoped, tag = 'internal scratch']
  %s0 = inlined_call_operand.hbm [shape: f32[16,9], index: 0, kind: input, shape index: {}]
  %s1 = inlined_call_operand.hbm [shape: f32[9,32], index: 1, kind: input, shape index: {}]
  %s2 = inlined_call_operand.hbm [shape: f32[32,128], index: 2, kind: input, shape index: {}]
  %s3 = inlined_call_operand.vmem [shape: f32[1,128], index: 3, kind: input, shape index: {}]
  %s4 = inlined_call_operand.hbm [shape: f32[16,128], index: 4, kind: output, shape index: {}]
  %s5 = sld [smem:[#allocation0]]
  $region38: #{model_forward.1} parent=0
    _
  %s7 = ssub.s32 1, %s5
  %s8 = scalar_select 0, %s7, %s5
  $region1: #{model_forward.1} parent=0
    #allocation2 [shape = 'u8[8192]{0}', space=vmem, size = 0x2000, scoped, tag = 'input window, operand 0, single buffered']
    #allocation3 [shape = 's32[1]{0}', space=sflag, size = 0x4, scoped, tag = 'scoped memory for model_forward.1']
    #allocation4 [shape = 's32[1]{0}', space=sflag, size = 0x4, scoped, tag = 'scoped memory for model_forward.1']
    #allocation5 [shape = 'u8[8192]{0}', space=vmem, size = 0x2000, scoped, tag = 'input window, operand 1, single buffered']
    #allocation6 [shape = 's32[1]{0}', space=sflag, size = 0x4, scoped, tag = 'scoped memory for model_forward.1']
    #allocation7 [shape = 'u8[16384]{0}', space=vmem, size = 0x4000, scoped, tag = 'input window, operand 2, single buffered']
    #allocation8 [shape = 'u8[8192]{0}', space=vmem, size = 0x2000, scoped, tag = 'output window, operand 0, single buffered']
    %9 = vsyncpa [#allocation3], 0
    %10 = vsyncpa [#allocation6], 0
    %11 = vsyncpa [#allocation4], 0
    // Predicated region
    $region2: #{model_forward.1} parent=1 // pred_check
      _
    $region3: #{model_forward.1} parent=1 // pred_check_branch
      %13 = sbr.rel (0) target = $region5
    $region4: #{model_forward.1} parent=1 // pred_region
      %s15 = ssub.s32 256, 256
      %16 = vsyncadd [#allocation3], %s15
      %s17 = sshll.u32 [#allocation2], 4
      %s18 = int_to_ptr.vmem [resolvable:$true] %s17
      %23 = dma.hbm_to_vmem [thread:$0]  %s0, 256, %s18, [#allocation3], 128, 128, 8
    $region5: #{model_forward.1} parent=1 // pred_fallthru
      _
    // Predicated region
    $region6: #{model_forward.1} parent=1 // pred_check
      _
    $region7: #{model_forward.1} parent=1 // pred_check_branch
      %25 = sbr.rel (0) target = $region9
    $region8: #{model_forward.1} parent=1 // pred_region
      %s27 = ssub.s32 256, 256
      %28 = vsyncadd [#allocation6], %s27
      %s29 = sshll.u32 [#allocation5], 4
      %s30 = int_to_ptr.vmem [resolvable:$true] %s29
      %35 = dma.hbm_to_vmem [thread:$0]  %s1, 256, %s30, [#allocation6], 128, 128, 8
    $region9: #{model_forward.1} parent=1 // pred_fallthru
      _
    // Predicated region
    $region10: #{model_forward.1} parent=1 // pred_check
      _
    $region11: #{model_forward.1} parent=1 // pred_check_branch
      %37 = sbr.rel (0) target = $region13
    $region12: #{model_forward.1} parent=1 // pred_region
      %s39 = ssub.s32 512, 512
      %40 = vsyncadd [#allocation6], %s39
      %s41 = sshll.u32 [#allocation7], 4
      %s42 = int_to_ptr.vmem [resolvable:$true] %s41
      %47 = dma.hbm_to_vmem [thread:$0]  %s2, 512, %s42, [#allocation6], 128, 128, 8
    $region13: #{model_forward.1} parent=1 // pred_fallthru
      _
    // Predicated region
    $region14: #{model_forward.1} parent=1 // pred_check
      _
    $region15: #{model_forward.1} parent=1 // pred_check_branch
      %49 = sbr.rel (0) target = $region17
    $region16: #{model_forward.1} parent=1 // pred_region
      _
    $region17: #{model_forward.1} parent=1 // pred_fallthru
      _
    // Predicated region
    $region18: #{model_forward.1} parent=1 // pred_check
      _
    $region19: #{model_forward.1} parent=1 // pred_check_branch
      %51 = sbr.rel (0) target = $region21
    $region20: #{model_forward.1} parent=1 // pred_region
      %52 = dma.done [#allocation3], 256
    $region21: #{model_forward.1} parent=1 // pred_fallthru
      _
    // Predicated region
    $region22: #{model_forward.1} parent=1 // pred_check
      _
    $region23: #{model_forward.1} parent=1 // pred_check_branch
      %54 = sbr.rel (0) target = $region25
    $region24: #{model_forward.1} parent=1 // pred_region
      %55 = dma.done [#allocation6], 256
    $region25: #{model_forward.1} parent=1 // pred_fallthru
      _
    // Predicated region
    $region26: #{model_forward.1} parent=1 // pred_check
      _
    $region27: #{model_forward.1} parent=1 // pred_check_branch
      %57 = sbr.rel (0) target = $region29
    $region28: #{model_forward.1} parent=1 // pred_region
      %58 = dma.done [#allocation6], 512
    $region29: #{model_forward.1} parent=1 // pred_fallthru
      _
    %v59 = vld [vmem:[#allocation2] sm:$0xff]
    %v60 = vld [vmem:[#allocation2 + $0x8] sm:$0xff]
    %v61 = vld [vmem:[#allocation5] sm:$0xff]
    %v62 = vld [vmem:[#allocation5 + $0x8] sm:$0x1]
    %vm63 = vcmask 72704
    %v65 = vsel %vm63, %v59, 0
    %v68 = vsel %vm63, %v60, 0
    %vm70 = vcmask 1040384
    %v72 = vsel %vm70, %v62, 0
    %74 = vmatprep.subr.mxu0 0.0
    %75 = vmatpush1.msra.mxu0 %v61
    %76 = vmatprep.subr.mxu0 0.0
    %77 = vmatpush1.msra.mxu0 %v72
    %78 = vmatprep.subr.mxu0 0.0
    %79 = vmatpush1.msra.mxu0 0.0
    %80 = vmatprep.subr.mxu0 0.0
    %81 = vmatpush1.msra.mxu0 0.0
    %82 = vmatprep.subr.mxu0 0.0
    %83 = vmatpush1.msra.mxu0 0.0
    %84 = vmatprep.subr.mxu0 0.0
    %85 = vmatpush1.msra.mxu0 0.0
    %86 = vmatprep.subr.mxu0 0.0
    %87 = vmatpush1.msra.mxu0 0.0
    %88 = vmatprep.subr.mxu0 0.0
    %89 = vmatpush1.msra.mxu0 0.0
    %90 = vmatprep.subr.mxu0 0.0
    %91 = vmatpush1.msra.mxu0 0.0
    %92 = vmatprep.subr.mxu0 0.0
    %93 = vmatpush1.msra.mxu0 0.0
    %94 = vmatprep.subr.mxu0 0.0
    %95 = vmatpush1.msra.mxu0 0.0
    %96 = vmatprep.subr.mxu0 0.0
    %97 = vmatpush1.msra.mxu0 0.0
    %98 = vmatprep.subr.mxu0 0.0
    %99 = vmatpush1.msra.mxu0 0.0
    %100 = vmatprep.subr.mxu0 0.0
    %101 = vmatpush1.msra.mxu0 0.0
    %102 = vmatprep.subr.mxu0 0.0
    %103 = vmatpush1.msra.mxu0 0.0
    %104 = vmatprep.subr.mxu0 0.0
    %105 = vmatpush1.msra.mxu0 0.0
    %106 = vmatprep.subr.mxu0 0.0
    %107 = vmatpush1.msra.mxu0 0.0
    %108 = vmatprep.subr.mxu0 0.0
    %109 = vmatpush1.msra.mxu0 0.0
    %110 = vmatprep.subr.mxu0 0.0
    %111 = vmatpush1.msra.mxu0 0.0
    %112 = vmatprep.subr.mxu0 0.0
    %113 = vmatpush1.msra.mxu0 0.0
    %114 = vmatprep.subr.mxu0 0.0
    %115 = vmatpush1.msra.mxu0 0.0
    %116 = vmatprep.subr.mxu0 0.0
    %117 = vmatpush1.msra.mxu0 0.0
    %118 = vmatprep.subr.mxu0 0.0
    %119 = vmatpush1.msra.mxu0 0.0
    %120 = vmatprep.subr.mxu0 0.0
    %121 = vmatpush1.msra.mxu0 0.0
    %122 = vmatprep.subr.mxu0 0.0
    %123 = vmatpush1.msra.mxu0 0.0
    %124 = vmatprep.subr.mxu0 0.0
    %125 = vmatpush1.msra.mxu0 0.0
    %126 = vmatprep.subr.mxu0 0.0
    %127 = vmatpush1.msra.mxu0 0.0
    %128 = vmatprep.subr.mxu0 0.0
    %129 = vmatpush1.msra.mxu0 0.0
    %130 = vmatprep.subr.mxu0 0.0
    %131 = vmatpush1.msra.mxu0 0.0
    %132 = vmatprep.subr.mxu0 0.0
    %133 = vmatpush1.msra.mxu0 0.0
    %134 = vmatprep.subr.mxu0 0.0
    %135 = vmatpush1.msra.mxu0 0.0
    %136 = vmatprep.subr.mxu0 0.0
    %137 = vmatpush1.msra.mxu0 0.0
    %138 = vmatprep.mubr.f32.mxu0 0.0
    %139 = vmatmul.mubr.f32.gmra.mrb[0].mxu0 %v65
    %v140 = vpop.f32.mrb[0].mxu0
    %v141 = vadd.f32 0.0, %v140
    %v142 = vpop.f32.mrb[0].mxu0
    %143 = vmatprep.mubr.f32.mxu0 0.0
    %144 = vmatmul.mubr.f32.gmra.mrb[0].mxu0 %v68
    %v145 = vpop.f32.mrb[0].mxu0
    %v146 = vadd.f32 0.0, %v145
    %v147 = vpop.f32.mrb[0].mxu0
    %148 = vdwg.mxu0
    %v149 = vxor.u32 %v141, 2147483648
    %v150 = vxor.u32 %v146, 2147483648
    %v151 = vmul.f32 %v149, 1.442695
    %v152 = vpow.pop %v151
    %v153 = vmul.f32 %v150, 1.442695
    %v154 = vpow.pop %v153
    %v155 = vadd.f32 %v152, 1.0
    %v156 = vadd.f32 %v154, 1.0
    %v157 = vrcp.pop %v155
    %v158 = vmul.f32 1.0, %v157
    %v159 = vrcp.pop %v156
    %v160 = vmul.f32 1.0, %v159
    %v161 = vld [vmem:[#allocation7] sm:$0xff]
    %v162 = vld [vmem:[#allocation7 + $0x8] sm:$0xff]
    %v163 = vld [vmem:[#allocation7 + $0x10] sm:$0xff]
    %v164 = vld [vmem:[#allocation7 + $0x18] sm:$0xff]
    %v165 = vld [vmem:[%s3] sm:$0x1]
    %v167 = vlaneseq
    %v168 = vshrl.u32 %v167, 7
    %v169 = vsub.s32 0, %v168
    %v170 = vrot.slane %v165, %v169
    %vm172 = vcmask 261120
    %v174 = vsel %vm172, %v158, 0
    %v177 = vsel %vm172, %v160, 0
    %179 = vmatprep.subr.mxu0 0.0
    %180 = vmatpush1.msra.mxu0 %v161
    %181 = vmatprep.subr.mxu0 0.0
    %182 = vmatpush1.msra.mxu0 %v162
    %183 = vmatprep.subr.mxu0 0.0
    %184 = vmatpush1.msra.mxu0 %v163
    %185 = vmatprep.subr.mxu0 0.0
    %186 = vmatpush1.msra.mxu0 %v164
    %187 = vmatprep.subr.mxu0 0.0
    %188 = vmatpush1.msra.mxu0 0.0
    %189 = vmatprep.subr.mxu0 0.0
    %190 = vmatpush1.msra.mxu0 0.0
    %191 = vmatprep.subr.mxu0 0.0
    %192 = vmatpush1.msra.mxu0 0.0
    %193 = vmatprep.subr.mxu0 0.0
    %194 = vmatpush1.msra.mxu0 0.0
    %195 = vmatprep.subr.mxu0 0.0
    %196 = vmatpush1.msra.mxu0 0.0
    %197 = vmatprep.subr.mxu0 0.0
    %198 = vmatpush1.msra.mxu0 0.0
    %199 = vmatprep.subr.mxu0 0.0
    %200 = vmatpush1.msra.mxu0 0.0
    %201 = vmatprep.subr.mxu0 0.0
    %202 = vmatpush1.msra.mxu0 0.0
    %203 = vmatprep.subr.mxu0 0.0
    %204 = vmatpush1.msra.mxu0 0.0
    %205 = vmatprep.subr.mxu0 0.0
    %206 = vmatpush1.msra.mxu0 0.0
    %207 = vmatprep.subr.mxu0 0.0
    %208 = vmatpush1.msra.mxu0 0.0
    %209 = vmatprep.subr.mxu0 0.0
    %210 = vmatpush1.msra.mxu0 0.0
    %211 = vmatprep.subr.mxu0 0.0
    %212 = vmatpush1.msra.mxu0 0.0
    %213 = vmatprep.subr.mxu0 0.0
    %214 = vmatpush1.msra.mxu0 0.0
    %215 = vmatprep.subr.mxu0 0.0
    %216 = vmatpush1.msra.mxu0 0.0
    %217 = vmatprep.subr.mxu0 0.0
    %218 = vmatpush1.msra.mxu0 0.0
    %219 = vmatprep.subr.mxu0 0.0
    %220 = vmatpush1.msra.mxu0 0.0
    %221 = vmatprep.subr.mxu0 0.0
    %222 = vmatpush1.msra.mxu0 0.0
    %223 = vmatprep.subr.mxu0 0.0
    %224 = vmatpush1.msra.mxu0 0.0
    %225 = vmatprep.subr.mxu0 0.0
    %226 = vmatpush1.msra.mxu0 0.0
    %227 = vmatprep.subr.mxu0 0.0
    %228 = vmatpush1.msra.mxu0 0.0
    %229 = vmatprep.subr.mxu0 0.0
    %230 = vmatpush1.msra.mxu0 0.0
    %231 = vmatprep.subr.mxu0 0.0
    %232 = vmatpush1.msra.mxu0 0.0
    %233 = vmatprep.subr.mxu0 0.0
    %234 = vmatpush1.msra.mxu0 0.0
    %235 = vmatprep.subr.mxu0 0.0
    %236 = vmatpush1.msra.mxu0 0.0
    %237 = vmatprep.subr.mxu0 0.0
    %238 = vmatpush1.msra.mxu0 0.0
    %239 = vmatprep.subr.mxu0 0.0
    %240 = vmatpush1.msra.mxu0 0.0
    %241 = vmatprep.subr.mxu0 0.0
    %242 = vmatpush1.msra.mxu0 0.0
    %243 = vmatprep.mubr.f32.mxu0 0.0
    %244 = vmatmul.mubr.f32.gmra.mrb[0].mxu0 %v174
    %v245 = vpop.f32.mrb[0].mxu0
    %v246 = vadd.f32 %v170, %v245
    %v247 = vpop.f32.mrb[0].mxu0
    %248 = vmatprep.mubr.f32.mxu0 0.0
    %249 = vmatmul.mubr.f32.gmra.mrb[0].mxu0 %v177
    %v250 = vpop.f32.mrb[0].mxu0
    %v251 = vadd.f32 %v170, %v250
    %v252 = vpop.f32.mrb[0].mxu0
    %253 = vdwg.mxu0
    %254 = vst [vmem:[#allocation8] sm:$0xff] %v246
    %255 = vst [vmem:[#allocation8 + $0x8] sm:$0xff] %v251
    // Predicated region
    $region30: #{model_forward.1} parent=1 // pred_check
      _
    $region31: #{model_forward.1} parent=1 // pred_check_branch
      %257 = sbr.rel (0) target = $region33
    $region32: #{model_forward.1} parent=1 // pred_region
      %s259 = ssub.s32 256, 256
      %260 = vsyncadd [#allocation4], %s259
      %s261 = sshll.u32 [#allocation8], 4
      %s262 = int_to_ptr.vmem [resolvable:$true] %s261
      %267 = dma.vmem_to_hbm [thread:$0]  %s262, 256, %s4, [#allocation4], 128, 128, 8
    $region33: #{model_forward.1} parent=1 // pred_fallthru
      _
    // Predicated region
    $region34: #{model_forward.1} parent=1 // pred_check
      _
    $region35: #{model_forward.1} parent=1 // pred_check_branch
      %269 = sbr.rel (0) target = $region37
    $region36: #{model_forward.1} parent=1 // pred_region
      %270 = dma.done [#allocation4], 256
    $region37: #{model_forward.1} parent=1 // pred_fallthru
      _
    %271 = vsyncpa [#allocation3], 1
    %272 = vsyncpa [#allocation6], 1
    %273 = vsyncpa [#allocation4], 1

</llo_original>
